<compile_context>
chip_gen: v7x
topology: tpu7x:2x2x1
jax: 0.10.0
libtpu: 0.0.40
codegen_flags: <defaults>
</compile_context>

<pallas_src>
import functools
import math

import numpy as np

import jax
import jax.numpy as jnp
from jax import lax
from jax.experimental import pallas as pl
from jax.experimental.pallas import tpu as pltpu


def _round_up(x, m):
    return (x + m - 1) // m * m


# ----------------------------------------------------------------------------
# Generic single-K-block GEMM: out = act(A @ W + b)    (used for conv1 only)
# ----------------------------------------------------------------------------
def _gemm_kernel(a_ref, w_ref, b_ref, o_ref, *, act):
    r = jnp.dot(a_ref[...], w_ref[...], preferred_element_type=jnp.float32) + b_ref[...]
    if act == "relu":
        r = jnp.maximum(r, 0.0)
    o_ref[...] = r.astype(o_ref.dtype)


def _pick_tm(M, cap=4096):
    """Largest M tile <= cap that divides M (avoids pad + slice); full M if it fits."""
    if M <= cap:
        return M
    best = 0
    for t in range(8, cap + 1, 8):
        if M % t == 0:
            best = t
    return best if best else cap


def _pick_tn(N, cap=512):
    if N <= cap:
        return N
    for t in (512, 384, 256, 128):
        if N % t == 0:
            return t
    return N


def gemm_bias_act(a, w_mat, b_row, act="relu", out_dtype=jnp.bfloat16):
    """a: (M, K) bf16, w_mat: (K, N) bf16 (pre-packed), b_row: (1, N) f32. Single K block."""
    M, K = a.shape
    Kw, N = w_mat.shape
    assert K == Kw, (K, Kw)
    a = a.astype(jnp.bfloat16)
    tm = _pick_tm(M)
    tn = _pick_tn(N)
    Mp = _round_up(M, tm)
    if Mp != M:                      # fallback only; unused for the model's layer sizes
        a = jnp.pad(a, ((0, Mp - M), (0, 0)))

    out = pl.pallas_call(
        functools.partial(_gemm_kernel, act=act),
        out_shape=jax.ShapeDtypeStruct((Mp, N), out_dtype),
        grid=(Mp // tm, N // tn),
        in_specs=[
            pl.BlockSpec((tm, K), lambda i, j: (i, 0)),
            pl.BlockSpec((K, tn), lambda i, j: (0, j)),
            pl.BlockSpec((1, tn), lambda i, j: (0, j)),
        ],
        out_specs=pl.BlockSpec((tm, tn), lambda i, j: (i, j)),
        compiler_params=pltpu.CompilerParams(
            dimension_semantics=("parallel", "parallel")),
    )(a, w_mat, b_row)
    return out[:M] if Mp != M else out


# ----------------------------------------------------------------------------
# Fused fire kernel: squeeze(1x1)+ReLU -> VMEM scratch -> fused expand(3x3)+ReLU
#   Activations are flat (H*W, C); the 9 expand taps are row shifts of the
#   zero-haloed scratch; width wrap is fixed by two (H*W, 1) edge masks.
# ----------------------------------------------------------------------------
def _fire_kernel(x_ref, sw_ref, sb_ref, ew_ref, eb_ref, ml_ref, mr_ref,
                 o_ref, sq_ref, *, H, W, PR):
    HW = H * W
    Sq = sw_ref.shape[1]

    # squeeze 1x1 conv + bias + ReLU; result stays entirely in VMEM
    s = jnp.dot(x_ref[0], sw_ref[...], preferred_element_type=jnp.float32)
    s = jnp.maximum(s + sb_ref[...], 0.0).astype(jnp.bfloat16)

    # zero halo rows, then write the squeeze result into the scratch interior
    zeros = jnp.zeros((PR, Sq), jnp.bfloat16)
    sq_ref[pl.ds(0, PR), :] = zeros
    sq_ref[pl.ds(PR + HW, PR), :] = zeros
    sq_ref[pl.ds(PR, HW), :] = s

    ml = ml_ref[...]   # (HW, 1): 0 where w == 0      (kills dw = -1 wrap)
    mr = mr_ref[...]   # (HW, 1): 0 where w == W - 1  (kills dw = +1 wrap)

    acc = None
    for kh in range(3):
        for kw in range(3):
            dh, dw = kh - 1, kw - 1
            t = sq_ref[pl.ds(PR + dh * W + dw, HW), :]
            if dw == -1:
                t = t * ml
            elif dw == 1:
                t = t * mr
            part = jnp.dot(t, ew_ref[pl.ds((kh * 3 + kw) * Sq, Sq), :],
                           preferred_element_type=jnp.float32)
            acc = part if acc is None else acc + part

    r = jnp.maximum(acc + eb_ref[...], 0.0)
    o_ref[0] = r.astype(o_ref.dtype)


def _edge_masks(H, W):
    w = np.arange(H * W) % W
    ml = (w != 0).astype(np.float32).reshape(-1, 1)
    mr = (w != W - 1).astype(np.float32).reshape(-1, 1)
    return jnp.asarray(ml, jnp.bfloat16), jnp.asarray(mr, jnp.bfloat16)


def fire(x, fp, H, W):
    """x: (B, H*W, Cin) bf16 -> (B, H*W, E) bf16. One pallas_call per fire module."""
    B, HW, Cin = x.shape
    assert HW == H * W
    Sq = fp["s_w"].shape[1]
    E = fp["e_w"].shape[1]
    assert fp["e_w"].shape[0] == 9 * Sq
    PR = _round_up(W + 1, 8)                       # halo rows (>= W+1, 8-aligned)
    ml, mr = _edge_masks(H, W)

    return pl.pallas_call(
        functools.partial(_fire_kernel, H=H, W=W, PR=PR),
        out_shape=jax.ShapeDtypeStruct((B, HW, E), jnp.bfloat16),
        grid=(B,),
        in_specs=[
            pl.BlockSpec((1, HW, Cin), lambda b: (b, 0, 0)),
            pl.BlockSpec((Cin, Sq), lambda b: (0, 0)),
            pl.BlockSpec((1, Sq), lambda b: (0, 0)),
            pl.BlockSpec((9 * Sq, E), lambda b: (0, 0)),
            pl.BlockSpec((1, E), lambda b: (0, 0)),
            pl.BlockSpec((HW, 1), lambda b: (0, 0)),
            pl.BlockSpec((HW, 1), lambda b: (0, 0)),
        ],
        out_specs=pl.BlockSpec((1, HW, E), lambda b: (b, 0, 0)),
        scratch_shapes=[pltpu.VMEM((HW + 2 * PR, Sq), jnp.bfloat16)],
        compiler_params=pltpu.CompilerParams(dimension_semantics=("parallel",)),
    )(x, fp["s_w"], fp["s_b"], fp["e_w"], fp["e_b"], ml, mr)


# ----------------------------------------------------------------------------
# Fused classifier kernel: Conv2d(512->1024, 1x1) + ReLU + AvgPool2d(13) (global mean)
# ----------------------------------------------------------------------------
def _classifier_kernel(x_ref, w_ref, b_ref, o_ref, *, inv_hw):
    r = jnp.dot(x_ref[0], w_ref[...], preferred_element_type=jnp.float32)
    r = jnp.maximum(r + b_ref[...], 0.0)
    o_ref[0] = jnp.sum(r, axis=0, keepdims=True) * inv_hw


def classifier_head(x, w_mat, b_row):
    """x: (B, H*W, 512) bf16 with H=W=13 -> (B, 1024) f32."""
    B, HW, Cin = x.shape
    N = w_mat.shape[1]
    out = pl.pallas_call(
        functools.partial(_classifier_kernel, inv_hw=1.0 / HW),
        out_shape=jax.ShapeDtypeStruct((B, 1, N), jnp.float32),
        grid=(B,),
        in_specs=[
            pl.BlockSpec((1, HW, Cin), lambda b: (b, 0, 0)),
            pl.BlockSpec((Cin, N), lambda b: (0, 0)),
            pl.BlockSpec((1, N), lambda b: (0, 0)),
        ],
        out_specs=pl.BlockSpec((1, 1, N), lambda b: (b, 0, 0)),
        compiler_params=pltpu.CompilerParams(dimension_semantics=("parallel",)),
    )(x, w_mat, b_row)
    return out.reshape(B, N)


# ----------------------------------------------------------------------------
# Channels-last glue (conv1 im2col is tiny: K=9, ~0.4 MB total)
# ----------------------------------------------------------------------------
def _im2col_3x3(x, stride, pad):
    B, H, W, C = x.shape
    if pad:
        x = jnp.pad(x, ((0, 0), (pad, pad), (pad, pad), (0, 0)))
    Ho = (H + 2 * pad - 3) // stride + 1
    Wo = (W + 2 * pad - 3) // stride + 1
    cols = []
    for kh in range(3):
        for kw in range(3):
            cols.append(x[:, kh:kh + (Ho - 1) * stride + 1:stride,
                          kw:kw + (Wo - 1) * stride + 1:stride, :])
    patches = jnp.concatenate(cols, axis=-1)            # (B, Ho, Wo, 9*C)
    return patches.reshape(B * Ho * Wo, 9 * C), Ho, Wo


def maxpool2d_ceil(x, k=3, s=2):
    # ceil_mode MaxPool2d (with PyTorch's "last window starts inside input" correction);
    # inputs are post-ReLU (>= 0) so 0 is a safe pad identity.
    B, H, W, C = x.shape

    def out_dim(n):
        o = -(-(n - k) // s) + 1
        if (o - 1) * s >= n:
            o -= 1
        return o

    Ho, Wo = out_dim(H), out_dim(W)
    ph = max(0, (Ho - 1) * s + k - H)
    pw = max(0, (Wo - 1) * s + k - W)
    return lax.reduce_window(
        x, jnp.array(0.0, x.dtype), lax.max,
        window_dimensions=(1, k, k, 1),
        window_strides=(1, s, s, 1),
        padding=((0, 0), (0, ph), (0, pw), (0, 0)))


# ----------------------------------------------------------------------------
# Model
# ----------------------------------------------------------------------------
def squeezenet_embedding(gp, x):
    """x: (B, 1, H, W) NCHW float32 -> (B, 1024) float32 (for a 13x13 classifier map)."""
    B = x.shape[0]
    # single layout conversion at the boundary; activations stay flat NHWC bf16
    x = jnp.transpose(x, (0, 2, 3, 1)).astype(jnp.bfloat16)

    # conv1: Conv2d(1, 64, 3, s2, p1) + ReLU (Cout padded 64 -> 128, extra channels are 0)
    a, H, W = _im2col_3x3(x, stride=2, pad=1)
    y = gemm_bias_act(a, gp["conv1_w"], gp["conv1_b"], act="relu")    # (B*H*W, 128)
    x = maxpool2d_ceil(y.reshape(B, H, W, y.shape[-1]))
    H, W = x.shape[1], x.shape[2]
    x = x.reshape(B, H * W, x.shape[-1])

    x = fire(x, gp["fire0"], H, W)
    x = fire(x, gp["fire1"], H, W)
    x = maxpool2d_ceil(x.reshape(B, H, W, x.shape[-1]))
    H, W = x.shape[1], x.shape[2]
    x = x.reshape(B, H * W, x.shape[-1])

    x = fire(x, gp["fire2"], H, W)
    x = fire(x, gp["fire3"], H, W)
    x = maxpool2d_ceil(x.reshape(B, H, W, x.shape[-1]))
    H, W = x.shape[1], x.shape[2]
    x = x.reshape(B, H * W, x.shape[-1])

    x = fire(x, gp["fire4"], H, W)
    x = fire(x, gp["fire5"], H, W)
    x = fire(x, gp["fire6"], H, W)
    x = fire(x, gp["fire7"], H, W)

    # classifier: Dropout(0.5), Conv2d(512, 1024, 1), ReLU, AvgPool2d(13); then flatten(1)
    # TODO(synk): Dropout(p=0.5) is treated as identity (eval / deterministic behavior).
    assert H == 13 and W == 13, "AvgPool2d(13) head expects a 13x13 map (use 207x207 input)"
    return classifier_head(x, gp["cls_w"], gp["cls_b"])


# ----------------------------------------------------------------------------
# Parameters: deterministic raw init + one-time GEMM packing (bf16, padded)
# ----------------------------------------------------------------------------
def make_raw_params(seed):
    keys = iter(jax.random.split(jax.random.PRNGKey(seed), 64))

    def u(shape, fan_in):
        s = 1.0 / math.sqrt(fan_in)
        return jax.random.uniform(next(keys), shape, jnp.float32, -s, s)

    def fire_p(cin, sq, e1, e3):
        return {
            "s_w": u((sq, cin, 1, 1), cin),     "s_b": u((sq,), cin),
            "e1_w": u((e1, sq, 1, 1), sq),      "e1_b": u((e1,), sq),
            "e3_w": u((e3, sq, 3, 3), sq * 9),  "e3_b": u((e3,), sq * 9),
        }

    return {
        "conv1_w": u((64, 1, 3, 3), 9), "conv1_b": u((64,), 9),
        "fire0": fire_p(64, 16, 64, 64),
        "fire1": fire_p(128, 16, 64, 64),
        "fire2": fire_p(128, 32, 128, 128),
        "fire3": fire_p(256, 32, 128, 128),
        "fire4": fire_p(256, 48, 192, 192),
        "fire5": fire_p(384, 48, 192, 192),
        "fire6": fire_p(384, 64, 256, 256),
        "fire7": fire_p(512, 64, 256, 256),
        "cls_w": u((1024, 512, 1, 1), 512), "cls_b": u((1024,), 512),
    }


def prepare_gemm_params(raw):
    """Pack every conv into a GEMM-ready bf16 (K, N) matrix + (1, N) f32 bias row, once."""
    bf = jnp.bfloat16

    def bias_row(b, n_pad=None):
        n = b.shape[0]
        npad = n if n_pad is None else n_pad
        return jnp.pad(b.astype(jnp.float32), (0, npad - n)).reshape(1, npad)

    def conv_mat(w):   # (Cout, Cin, kh, kw) -> (kh*kw*Cin, Cout), matches tap-major ordering
        cout, cin, kh, kw = w.shape
        return jnp.transpose(w, (2, 3, 1, 0)).reshape(kh * kw * cin, cout).astype(jnp.float32)

    gp = {}
    # conv1: pad Cout 64 -> 128 so downstream activations stay lane-dense; the extra
    # channels are exactly zero and fire0's squeeze weight has zero rows there.
    c1 = conv_mat(raw["conv1_w"])                              # (9, 64)
    gp["conv1_w"] = jnp.pad(c1, ((0, 0), (0, 64))).astype(bf)  # (9, 128)
    gp["conv1_b"] = bias_row(raw["conv1_b"], 128)

    carried = {"fire0": (64, 128), "fire1": (128, 128),
               "fire2": (128, 128), "fire3": (256, 256),
               "fire4": (256, 256), "fire5": (384, 384),
               "fire6": (384, 384), "fire7": (512, 512)}
    for name, (cin_real, cin_carried) in carried.items():
        p = raw[name]
        sq = p["s_w"].shape[0]
        e1, e3 = p["e1_w"].shape[0], p["e3_w"].shape[0]
        sw = jnp.zeros((cin_carried, sq), jnp.float32)
        sw = sw.at[:cin_real].set(p["s_w"][:, :, 0, 0].T)
        # fused expand: the 1x1 branch becomes a 3x3 kernel nonzero only at the centre tap
        wc = jnp.zeros((e1 + e3, sq, 3, 3), jnp.float32)
        wc = wc.at[:e1, :, 1, 1].set(p["e1_w"][:, :, 0, 0])
        wc = wc.at[e1:].set(p["e3_w"])
        gp[name] = {
            "s_w": sw.astype(bf), "s_b": bias_row(p["s_b"]),
            "e_w": conv_mat(wc).astype(bf),                    # (9*sq, e1+e3)
            "e_b": bias_row(jnp.concatenate([p["e1_b"], p["e3_b"]])),
        }

    gp["cls_w"] = conv_mat(raw["cls_w"]).astype(bf)            # (512, 1024)
    gp["cls_b"] = bias_row(raw["cls_b"])
    return gp


# ----------------------------------------------------------------------------
if __name__ == "__main__":
    key = jax.random.PRNGKey(0)
    # 207x207 is the smallest square input for which the (modified) SqueezeNet classifier's
    # AvgPool2d(13) sees a 13x13 feature map -> (B, 1024) embedding after flatten.
    x = jax.random.normal(key, (2, 1, 207, 207), jnp.float32)

    raw = make_raw_params(42)
    gp = prepare_gemm_params(raw)

    # --- sanity check 1: GEMM kernel vs plain jnp (bf16 tolerance) ---
    ka, kw = jax.random.split(jax.random.PRNGKey(1))
    a_t = jax.random.normal(ka, (300, 144), jnp.float32).astype(jnp.bfloat16)
    w_t = jax.random.normal(kw, (144, 128), jnp.float32).astype(jnp.bfloat16)
    b_t = jnp.linspace(-1.0, 1.0, 128, dtype=jnp.float32)
    got = gemm_bias_act(a_t, w_t, b_t.reshape(1, 128), act="relu", out_dtype=jnp.float32)
    want = jnp.maximum(a_t.astype(jnp.float32) @ w_t.astype(jnp.float32) + b_t, 0.0)
    assert jnp.allclose(got, want, rtol=2e-2, atol=2e-2), "GEMM kernel mismatch"

    # --- sanity check 2: fused fire kernel vs plain-JAX conv reference ---
    Ht, Wt, Cint, Sqt, Et = 8, 8, 32, 16, 48
    kx, kw1, kw2 = jax.random.split(jax.random.PRNGKey(2), 3)
    xt = jax.random.normal(kx, (1, Ht * Wt, Cint), jnp.float32).astype(jnp.bfloat16)
    sw_t = (jax.random.normal(kw1, (Cint, Sqt), jnp.float32) * 0.2).astype(jnp.bfloat16)
    sb_t = jnp.linspace(-0.5, 0.5, Sqt, dtype=jnp.float32).reshape(1, Sqt)
    ew_conv = jax.random.normal(kw2, (3, 3, Sqt, Et), jnp.float32) * 0.2   # HWIO
    eb_t = jnp.linspace(-0.5, 0.5, Et, dtype=jnp.float32).reshape(1, Et)
    fp_t = {"s_w": sw_t, "s_b": sb_t,
            "e_w": ew_conv.reshape(9 * Sqt, Et).astype(jnp.bfloat16), "e_b": eb_t}
    got_f = fire(xt, fp_t, Ht, Wt).astype(jnp.float32).reshape(Ht, Wt, Et)
    s_ref = jnp.maximum(xt.astype(jnp.float32) @ sw_t.astype(jnp.float32) + sb_t, 0.0)
    s_ref = s_ref.astype(jnp.bfloat16).astype(jnp.float32).reshape(1, Ht, Wt, Sqt)
    e_ref = lax.conv_general_dilated(
        s_ref, ew_conv, window_strides=(1, 1), padding=((1, 1), (1, 1)),
        dimension_numbers=("NHWC", "HWIO", "NHWC"))
    want_f = jnp.maximum(e_ref + eb_t, 0.0)[0]
    assert jnp.allclose(got_f, want_f, rtol=5e-2, atol=5e-2), "fire kernel mismatch"

    # --- full forward ---
    fwd = jax.jit(squeezenet_embedding)
    emb = fwd(gp, x)
    jax.block_until_ready(emb)

    assert emb.shape == (2, 1024), emb.shape
    assert bool(jnp.all(jnp.isfinite(emb)))
    print("KERNEL_OK")
</pallas_src>

<mosaic_0001>
module attributes {stable_mosaic.version = 11 : i64} {
  func.func @_gemm_kernel(%arg0: i32, %arg1: i32, %arg2: memref<300x144xbf16, #tpu.memory_space<vmem>>, %arg3: memref<144x128xbf16, #tpu.memory_space<vmem>>, %arg4: memref<1x128xf32, #tpu.memory_space<vmem>>, %arg5: memref<300x128xf32, #tpu.memory_space<vmem>>) attributes {dimension_semantics = [#tpu.dimension_semantics<parallel>, #tpu.dimension_semantics<parallel>], iteration_bounds = array<i64: 1, 1>, scalar_prefetch = 0 : i64, scratch_operands = 0 : i64, tpu.core_type = #tpu.core_type<tc>, window_params = [{transform_indices = @transform_0, window_bounds = array<i64: 300, 144>}, {transform_indices = @transform_1, window_bounds = array<i64: 144, 128>}, {transform_indices = @transform_2, window_bounds = array<i64: 1, 128>}, {transform_indices = @transform_3, window_bounds = array<i64: 300, 128>}]} {
    %c0 = arith.constant 0 : index
    %c0_0 = arith.constant 0 : index
    %0 = vector.load %arg2[%c0, %c0_0] : memref<300x144xbf16, #tpu.memory_space<vmem>>, vector<300x144xbf16>
    %c0_1 = arith.constant 0 : index
    %c0_2 = arith.constant 0 : index
    %1 = vector.load %arg3[%c0_1, %c0_2] : memref<144x128xbf16, #tpu.memory_space<vmem>>, vector<144x128xbf16>
    %cst = arith.constant dense<0.000000e+00> : vector<300x128xf32>
    %2 = tpu.matmul %0, %1, %cst {dimension_numbers = #tpu.dot_dimension_numbers<[1], [0], [0], [1], [0, 0, 1, 1], [], []>} : vector<300x144xbf16>, vector<144x128xbf16>, vector<300x128xf32> -> vector<300x128xf32>
    %c0_3 = arith.constant 0 : index
    %c0_4 = arith.constant 0 : index
    %3 = vector.load %arg4[%c0_3, %c0_4] : memref<1x128xf32, #tpu.memory_space<vmem>>, vector<1x128xf32>
    %4 = vector.broadcast %3 : vector<1x128xf32> to vector<300x128xf32>
    %5 = arith.addf %2, %4 : vector<300x128xf32>
    %cst_5 = arith.constant 0.000000e+00 : f32
    %6 = vector.broadcast %cst_5 : f32 to vector<300x128xf32>
    %7 = arith.maximumf %5, %6 : vector<300x128xf32>
    %c0_6 = arith.constant 0 : index
    %c0_7 = arith.constant 0 : index
    %8 = vector.load %arg5[%c0_6, %c0_7] : memref<300x128xf32, #tpu.memory_space<vmem>>, vector<300x128xf32>
    tpu.vector_store %arg5[%c0_6, %c0_7], %7 {strides = array<i32>} : memref<300x128xf32, #tpu.memory_space<vmem>>, vector<300x128xf32>,
    return
  }
  func.func @transform_0(%arg0: i32, %arg1: i32) -> (i32, i32) {
    %c0_i32 = arith.constant 0 : i32
    %c0_i32_0 = arith.constant 0 : i32
    return %arg0, %c0_i32 : i32, i32
  }
  func.func @transform_1(%arg0: i32, %arg1: i32) -> (i32, i32) {
    %c0_i32 = arith.constant 0 : i32
    %c0_i32_0 = arith.constant 0 : i32
    return %c0_i32, %arg1 : i32, i32
  }
  func.func @transform_2(%arg0: i32, %arg1: i32) -> (i32, i32) {
    %c0_i32 = arith.constant 0 : i32
    %c0_i32_0 = arith.constant 0 : i32
    return %c0_i32, %arg1 : i32, i32
  }
  func.func @transform_3(%arg0: i32, %arg1: i32) -> (i32, i32) {
    %c0_i32 = arith.constant 0 : i32
    return %arg0, %arg1 : i32, i32
  }
}

</mosaic_0001>

<llo_original>
// kernel: tpu_custom_call.1
$region0: #{tpu_custom_call.1}
  #allocation0 [shape = 'u32[]', space=smem, size = 0x4, offset = 0x4, fixed_abs, tag = 'smem constant byte address 0x4 - core index']
  #allocation1 [shape = 'u32[144,128]{1,0:T(1,128)}', space=vmem, size = 0x12000, scoped, tag = 'internal scratch']
  %s0 = inlined_call_operand.vmem [shape: bf16[300,144], index: 0, kind: input, shape index: {}]
  %s1 = inlined_call_operand.vmem [shape: bf16[144,128], index: 1, kind: input, shape index: {}]
  %s2 = inlined_call_operand.vmem [shape: f32[1,128], index: 2, kind: input, shape index: {}]
  %s3 = inlined_call_operand.hbm [shape: f32[300,128], index: 3, kind: output, shape index: {}]
  %s4 = sld [smem:[#allocation0]]
  $region22: #{tpu_custom_call.1} parent=0
    _
  %s6 = ssub.s32 1, %s4
  %s7 = scalar_select 0, %s6, %s4
  $region1: #{tpu_custom_call.1} parent=0
    #allocation2 [shape = 'u8[155648]{0}', space=vmem, size = 0x26000, scoped, tag = 'output window, operand 0, single buffered']
    #allocation3 [shape = 's32[1]{0}', space=sflag, size = 0x4, scoped, tag = 'scoped memory for tpu_custom_call.1']
    %8 = vsyncpa [#allocation3], 0
    // Predicated region
    $region2: #{tpu_custom_call.1} parent=1 // pred_check
      _
    $region3: #{tpu_custom_call.1} parent=1 // pred_check_branch
      %10 = sbr.rel (0) target = $region5
    $region4: #{tpu_custom_call.1} parent=1 // pred_region
      _
    $region5: #{tpu_custom_call.1} parent=1 // pred_fallthru
      _
    // Predicated region
    $region6: #{tpu_custom_call.1} parent=1 // pred_check
      _
    $region7: #{tpu_custom_call.1} parent=1 // pred_check_branch
      %12 = sbr.rel (0) target = $region9
    $region8: #{tpu_custom_call.1} parent=1 // pred_region
      _
    $region9: #{tpu_custom_call.1} parent=1 // pred_fallthru
      _
    // Predicated region
    $region10: #{tpu_custom_call.1} parent=1 // pred_check
      _
    $region11: #{tpu_custom_call.1} parent=1 // pred_check_branch
      %14 = sbr.rel (0) target = $region13
    $region12: #{tpu_custom_call.1} parent=1 // pred_region
      _
    $region13: #{tpu_custom_call.1} parent=1 // pred_fallthru
      _
    %v16 = vld [vmem:[%s0] sm:$0xff]
    %v17 = vld [vmem:[%s0 + $0x8] sm:$0xff]
    %v18 = vld [vmem:[%s0 + $0x10] sm:$0xff]
    %v19 = vld [vmem:[%s0 + $0x18] sm:$0xff]
    %v20 = vld [vmem:[%s0 + $0x20] sm:$0xff]
    %v21 = vld [vmem:[%s0 + $0x28] sm:$0xff]
    %v22 = vld [vmem:[%s0 + $0x30] sm:$0xff]
    %v23 = vld [vmem:[%s0 + $0x38] sm:$0xff]
    %v24 = vld [vmem:[%s0 + $0x40] sm:$0xff]
    %v25 = vld [vmem:[%s0 + $0x48] sm:$0xff]
    %v26 = vld [vmem:[%s0 + $0x50] sm:$0xff]
    %v27 = vld [vmem:[%s0 + $0x58] sm:$0xff]
    %v28 = vld [vmem:[%s0 + $0x60] sm:$0xff]
    %v29 = vld [vmem:[%s0 + $0x68] sm:$0xff]
    %v30 = vld [vmem:[%s0 + $0x70] sm:$0xff]
    %v31 = vld [vmem:[%s0 + $0x78] sm:$0xff]
    %v32 = vld [vmem:[%s0 + $0x80] sm:$0xff]
    %v33 = vld [vmem:[%s0 + $0x88] sm:$0xff]
    %v34 = vld [vmem:[%s0 + $0x90] sm:$0xff]
    %v35 = vld [vmem:[%s0 + $0x98] sm:$0xff]
    %v36 = vld [vmem:[%s0 + $0xa0] sm:$0xff]
    %v37 = vld [vmem:[%s0 + $0xa8] sm:$0xff]
    %v38 = vld [vmem:[%s0 + $0xb0] sm:$0xff]
    %v39 = vld [vmem:[%s0 + $0xb8] sm:$0xff]
    %v40 = vld [vmem:[%s0 + $0xc0] sm:$0xff]
    %v41 = vld [vmem:[%s0 + $0xc8] sm:$0xff]
    %v42 = vld [vmem:[%s0 + $0xd0] sm:$0xff]
    %v43 = vld [vmem:[%s0 + $0xd8] sm:$0xff]
    %v44 = vld [vmem:[%s0 + $0xe0] sm:$0xff]
    %v45 = vld [vmem:[%s0 + $0xe8] sm:$0xff]
    %v46 = vld [vmem:[%s0 + $0xf0] sm:$0xff]
    %v47 = vld [vmem:[%s0 + $0xf8] sm:$0xff]
    %v48 = vld [vmem:[%s0 + $0x100] sm:$0xff]
    %v49 = vld [vmem:[%s0 + $0x108] sm:$0xff]
    %v50 = vld [vmem:[%s0 + $0x110] sm:$0xff]
    %v51 = vld [vmem:[%s0 + $0x118] sm:$0xff]
    %v52 = vld [vmem:[%s0 + $0x120] sm:$0xff]
    %v53 = vld [vmem:[%s0 + $0x128] sm:$0x33]
    %v54 = vld [vmem:[%s1] sm:$0xf]
    %v55 = vld [vmem:[%s1 + $0x4] sm:$0xf]
    %v56 = vld [vmem:[%s1 + $0x8] sm:$0xf]
    %v57 = vld [vmem:[%s1 + $0xc] sm:$0xf]
    %v58 = vld [vmem:[%s1 + $0x10] sm:$0xf]
    %v59 = vld [vmem:[%s1 + $0x14] sm:$0xf]
    %v60 = vld [vmem:[%s1 + $0x18] sm:$0xf]
    %v61 = vld [vmem:[%s1 + $0x1c] sm:$0xf]
    %v62 = vld [vmem:[%s1 + $0x20] sm:$0xf]
    %v63 = vld [vmem:[%s1 + $0x24] sm:$0xf]
    %v64 = vld [vmem:[%s1 + $0x28] sm:$0xf]
    %v65 = vld [vmem:[%s1 + $0x2c] sm:$0xf]
    %v66 = vld [vmem:[%s1 + $0x30] sm:$0xf]
    %v67 = vld [vmem:[%s1 + $0x34] sm:$0xf]
    %v68 = vld [vmem:[%s1 + $0x38] sm:$0xf]
    %v69 = vld [vmem:[%s1 + $0x3c] sm:$0xf]
    %v70 = vld [vmem:[%s1 + $0x40] sm:$0xf]
    %v71 = vld [vmem:[%s1 + $0x44] sm:$0xf]
    %v72 = vld [vmem:[%s2] sm:$0x1]
    %v74 = vlaneseq
    %v75 = vshrl.u32 %v74, 7
    %v76 = vsub.s32 0, %v75
    %v77 = vrot.slane %v72, %v76
    %v117 = vunpack.c.l.b16 %v16
    %v118 = vunpack.c.h.b16 %v16
    %v119 = vunpack.c.l.b16 %v17
    %v120 = vunpack.c.h.b16 %v17
    %v121 = vunpack.c.l.b16 %v18
    %v122 = vunpack.c.h.b16 %v18
    %v123 = vunpack.c.l.b16 %v19
    %v124 = vunpack.c.h.b16 %v19
    %v125 = vunpack.c.l.b16 %v20
    %v126 = vunpack.c.h.b16 %v20
    %v127 = vunpack.c.l.b16 %v21
    %v128 = vunpack.c.h.b16 %v21
    %v129 = vunpack.c.l.b16 %v22
    %v130 = vunpack.c.h.b16 %v22
    %v131 = vunpack.c.l.b16 %v23
    %v132 = vunpack.c.h.b16 %v23
    %v133 = vunpack.c.l.b16 %v24
    %v134 = vunpack.c.h.b16 %v24
    %v135 = vunpack.c.l.b16 %v25
    %v136 = vunpack.c.h.b16 %v25
    %v137 = vunpack.c.l.b16 %v26
    %v138 = vunpack.c.h.b16 %v26
    %v139 = vunpack.c.l.b16 %v27
    %v140 = vunpack.c.h.b16 %v27
    %v141 = vunpack.c.l.b16 %v28
    %v142 = vunpack.c.h.b16 %v28
    %v143 = vunpack.c.l.b16 %v29
    %v144 = vunpack.c.h.b16 %v29
    %v145 = vunpack.c.l.b16 %v30
    %v146 = vunpack.c.h.b16 %v30
    %v147 = vunpack.c.l.b16 %v31
    %v148 = vunpack.c.h.b16 %v31
    %v149 = vunpack.c.l.b16 %v32
    %v150 = vunpack.c.h.b16 %v32
    %v151 = vunpack.c.l.b16 %v33
    %v152 = vunpack.c.h.b16 %v33
    %v153 = vunpack.c.l.b16 %v34
    %v154 = vunpack.c.h.b16 %v34
    %v155 = vunpack.c.l.b16 %v35
    %v156 = vunpack.c.h.b16 %v35
    %v157 = vunpack.c.l.b16 %v36
    %v158 = vunpack.c.h.b16 %v36
    %v159 = vunpack.c.l.b16 %v37
    %v160 = vunpack.c.h.b16 %v37
    %v161 = vunpack.c.l.b16 %v38
    %v162 = vunpack.c.h.b16 %v38
    %v163 = vunpack.c.l.b16 %v39
    %v164 = vunpack.c.h.b16 %v39
    %v165 = vunpack.c.l.b16 %v40
    %v166 = vunpack.c.h.b16 %v40
    %v167 = vunpack.c.l.b16 %v41
    %v168 = vunpack.c.h.b16 %v41
    %v169 = vunpack.c.l.b16 %v42
    %v170 = vunpack.c.h.b16 %v42
    %v171 = vunpack.c.l.b16 %v43
    %v172 = vunpack.c.h.b16 %v43
    %v173 = vunpack.c.l.b16 %v44
    %v174 = vunpack.c.h.b16 %v44
    %v175 = vunpack.c.l.b16 %v45
    %v176 = vunpack.c.h.b16 %v45
    %v177 = vunpack.c.l.b16 %v46
    %v178 = vunpack.c.h.b16 %v46
    %v179 = vunpack.c.l.b16 %v47
    %v180 = vunpack.c.h.b16 %v47
    %v181 = vunpack.c.l.b16 %v48
    %v182 = vunpack.c.h.b16 %v48
    %v183 = vunpack.c.l.b16 %v49
    %v184 = vunpack.c.h.b16 %v49
    %v185 = vunpack.c.l.b16 %v50
    %v186 = vunpack.c.h.b16 %v50
    %v187 = vunpack.c.l.b16 %v51
    %v188 = vunpack.c.h.b16 %v51
    %v189 = vunpack.c.l.b16 %v52
    %v190 = vunpack.c.h.b16 %v52
    %v191 = vunpack.c.l.b16 %v53
    %v192 = vunpack.c.h.b16 %v53
    %v193 = vpack.c.b16 %v119, %v117
    %v194 = vpack.c.b16 %v120, %v118
    %v195 = vpack.c.b16 %v123, %v121
    %v196 = vpack.c.b16 %v124, %v122
    %v197 = vpack.c.b16 %v127, %v125
    %v198 = vpack.c.b16 %v128, %v126
    %v199 = vpack.c.b16 %v131, %v129
    %v200 = vpack.c.b16 %v132, %v130
    %v201 = vpack.c.b16 %v135, %v133
    %v202 = vpack.c.b16 %v136, %v134
    %v203 = vpack.c.b16 %v139, %v137
    %v204 = vpack.c.b16 %v140, %v138
    %v205 = vpack.c.b16 %v143, %v141
    %v206 = vpack.c.b16 %v144, %v142
    %v207 = vpack.c.b16 %v147, %v145
    %v208 = vpack.c.b16 %v148, %v146
    %v209 = vpack.c.b16 %v151, %v149
    %v210 = vpack.c.b16 %v152, %v150
    %v211 = vpack.c.b16 %v155, %v153
    %v212 = vpack.c.b16 %v156, %v154
    %v213 = vpack.c.b16 %v159, %v157
    %v214 = vpack.c.b16 %v160, %v158
    %v215 = vpack.c.b16 %v163, %v161
    %v216 = vpack.c.b16 %v164, %v162
    %v217 = vpack.c.b16 %v167, %v165
    %v218 = vpack.c.b16 %v168, %v166
    %v219 = vpack.c.b16 %v171, %v169
    %v220 = vpack.c.b16 %v172, %v170
    %v221 = vpack.c.b16 %v175, %v173
    %v222 = vpack.c.b16 %v176, %v174
    %v223 = vpack.c.b16 %v179, %v177
    %v224 = vpack.c.b16 %v180, %v178
    %v225 = vpack.c.b16 %v183, %v181
    %v226 = vpack.c.b16 %v184, %v182
    %v227 = vpack.c.b16 %v187, %v185
    %v228 = vpack.c.b16 %v188, %v186
    %v229 = vpack.c.b16 %v191, %v189
    %v230 = vpack.c.b16 %v192, %v190
    %v268 = vunpack.c.l.b16 %v54
    %v269 = vunpack.c.l.b16 %v55
    %v270 = vunpack.c.l.b16 %v56
    %v271 = vunpack.c.l.b16 %v57
    %v272 = vunpack.c.l.b16 %v58
    %v273 = vunpack.c.l.b16 %v59
    %v274 = vunpack.c.l.b16 %v60
    %v275 = vunpack.c.l.b16 %v61
    %v276 = vunpack.c.l.b16 %v62
    %v277 = vunpack.c.l.b16 %v63
    %v278 = vunpack.c.l.b16 %v64
    %v279 = vunpack.c.l.b16 %v65
    %v280 = vunpack.c.l.b16 %v66
    %v281 = vunpack.c.l.b16 %v67
    %v282 = vunpack.c.l.b16 %v68
    %v283 = vunpack.c.l.b16 %v69
    %v284 = vunpack.c.l.b16 %v70
    %v285 = vunpack.c.l.b16 %v71
    %v286 = vpack.c.b16 %v269, %v268
    %v287 = vpack.c.b16 %v271, %v270
    %v288 = vpack.c.b16 %v273, %v272
    %v289 = vpack.c.b16 %v275, %v274
    %v290 = vpack.c.b16 %v277, %v276
    %v291 = vpack.c.b16 %v279, %v278
    %v292 = vpack.c.b16 %v281, %v280
    %v293 = vpack.c.b16 %v283, %v282
    %v294 = vpack.c.b16 %v285, %v284
    %vm304 = vcmask 130048
    %v306 = vsel %vm304, %v194, 0
    %v309 = vsel %vm304, %v196, 0
    %v312 = vsel %vm304, %v198, 0
    %v315 = vsel %vm304, %v200, 0
    %v318 = vsel %vm304, %v202, 0
    %v321 = vsel %vm304, %v204, 0
    %v324 = vsel %vm304, %v206, 0
    %v327 = vsel %vm304, %v208, 0
    %v330 = vsel %vm304, %v210, 0
    %v333 = vsel %vm304, %v212, 0
    %v336 = vsel %vm304, %v214, 0
    %v339 = vsel %vm304, %v216, 0
    %v342 = vsel %vm304, %v218, 0
    %v345 = vsel %vm304, %v220, 0
    %v348 = vsel %vm304, %v222, 0
    %v351 = vsel %vm304, %v224, 0
    %v354 = vsel %vm304, %v226, 0
    %v357 = vsel %vm304, %v228, 0
    %v360 = vsel %vm304, %v230, 0
    %362 = vmatprep.subr.bf16.mxu0 0
    %363 = vmatpush1.bf16.msra.mxu0 %v286
    %364 = vmatprep.subr.bf16.mxu0 0
    %365 = vmatpush1.bf16.msra.mxu0 %v287
    %366 = vmatprep.subr.bf16.mxu0 0
    %367 = vmatpush1.bf16.msra.mxu0 %v288
    %368 = vmatprep.subr.bf16.mxu0 0
    %369 = vmatpush1.bf16.msra.mxu0 %v289
    %370 = vmatprep.subr.bf16.mxu0 0
    %371 = vmatpush1.bf16.msra.mxu0 %v290
    %372 = vmatprep.subr.bf16.mxu0 0
    %373 = vmatpush1.bf16.msra.mxu0 %v291
    %374 = vmatprep.subr.bf16.mxu0 0
    %375 = vmatpush1.bf16.msra.mxu0 %v292
    %376 = vmatprep.subr.bf16.mxu0 0
    %377 = vmatpush1.bf16.msra.mxu0 %v293
    %378 = vmatprep.subr.bf16.mxu0 0
    %379 = vmatpush1.bf16.msra.mxu0 %v294
    %380 = vmatprep.subr.bf16.mxu0 0
    %381 = vmatpush1.bf16.msra.mxu0 0
    %382 = vmatprep.subr.bf16.mxu0 0
    %383 = vmatpush1.bf16.msra.mxu0 0
    %384 = vmatprep.subr.bf16.mxu0 0
    %385 = vmatpush1.bf16.msra.mxu0 0
    %386 = vmatprep.subr.bf16.mxu0 0
    %387 = vmatpush1.bf16.msra.mxu0 0
    %388 = vmatprep.subr.bf16.mxu0 0
    %389 = vmatpush1.bf16.msra.mxu0 0
    %390 = vmatprep.subr.bf16.mxu0 0
    %391 = vmatpush1.bf16.msra.mxu0 0
    %392 = vmatprep.subr.bf16.mxu0 0
    %393 = vmatpush1.bf16.msra.mxu0 0
    %394 = vmatprep.mubr.bf16.mxu0 %v306
    %395 = vmatmul.mubr.bf16.gmra.mrb[0].mxu0 %v193
    %v396 = vpop.f32.mrb[0].mxu0
    %v397 = vadd.f32 %v77, %v396
    %v398 = vpop.f32.mrb[0].mxu0
    %v399 = vpop.f32.mrb[0].mxu0
    %v400 = vadd.f32 %v77, %v399
    %v401 = vpop.f32.mrb[0].mxu0
    %402 = vmatprep.mubr.bf16.mxu0 %v309
    %403 = vmatmul.mubr.bf16.gmra.mrb[0].mxu0 %v195
    %v404 = vpop.f32.mrb[0].mxu0
    %v405 = vadd.f32 %v77, %v404
    %v406 = vpop.f32.mrb[0].mxu0
    %v407 = vpop.f32.mrb[0].mxu0
    %v408 = vadd.f32 %v77, %v407
    %v409 = vpop.f32.mrb[0].mxu0
    %410 = vmatprep.mubr.bf16.mxu0 %v312
    %411 = vmatmul.mubr.bf16.gmra.mrb[0].mxu0 %v197
    %v412 = vpop.f32.mrb[0].mxu0
    %v413 = vadd.f32 %v77, %v412
    %v414 = vpop.f32.mrb[0].mxu0
    %v415 = vpop.f32.mrb[0].mxu0
    %v416 = vadd.f32 %v77, %v415
    %v417 = vpop.f32.mrb[0].mxu0
    %418 = vmatprep.mubr.bf16.mxu0 %v315
    %419 = vmatmul.mubr.bf16.gmra.mrb[0].mxu0 %v199
    %v420 = vpop.f32.mrb[0].mxu0
    %v421 = vadd.f32 %v77, %v420
    %v422 = vpop.f32.mrb[0].mxu0
    %v423 = vpop.f32.mrb[0].mxu0
    %v424 = vadd.f32 %v77, %v423
    %v425 = vpop.f32.mrb[0].mxu0
    %426 = vmatprep.mubr.bf16.mxu0 %v318
    %427 = vmatmul.mubr.bf16.gmra.mrb[0].mxu0 %v201
    %v428 = vpop.f32.mrb[0].mxu0
    %v429 = vadd.f32 %v77, %v428
    %v430 = vpop.f32.mrb[0].mxu0
    %v431 = vpop.f32.mrb[0].mxu0
    %v432 = vadd.f32 %v77, %v431
    %v433 = vpop.f32.mrb[0].mxu0
    %434 = vmatprep.mubr.bf16.mxu0 %v321
    %435 = vmatmul.mubr.bf16.gmra.mrb[0].mxu0 %v203
    %v436 = vpop.f32.mrb[0].mxu0
    %v437 = vadd.f32 %v77, %v436
    %v438 = vpop.f32.mrb[0].mxu0
    %v439 = vpop.f32.mrb[0].mxu0
    %v440 = vadd.f32 %v77, %v439
    %v441 = vpop.f32.mrb[0].mxu0
    %442 = vmatprep.mubr.bf16.mxu0 %v324
    %443 = vmatmul.mubr.bf16.gmra.mrb[0].mxu0 %v205
    %v444 = vpop.f32.mrb[0].mxu0
    %v445 = vadd.f32 %v77, %v444
    %v446 = vpop.f32.mrb[0].mxu0
    %v447 = vpop.f32.mrb[0].mxu0
    %v448 = vadd.f32 %v77, %v447
    %v449 = vpop.f32.mrb[0].mxu0
    %450 = vmatprep.mubr.bf16.mxu0 %v327
    %451 = vmatmul.mubr.bf16.gmra.mrb[0].mxu0 %v207
    %v452 = vpop.f32.mrb[0].mxu0
    %v453 = vadd.f32 %v77, %v452
    %v454 = vpop.f32.mrb[0].mxu0
    %v455 = vpop.f32.mrb[0].mxu0
    %v456 = vadd.f32 %v77, %v455
    %v457 = vpop.f32.mrb[0].mxu0
    %458 = vmatprep.mubr.bf16.mxu0 %v330
    %459 = vmatmul.mubr.bf16.gmra.mrb[0].mxu0 %v209
    %v460 = vpop.f32.mrb[0].mxu0
    %v461 = vadd.f32 %v77, %v460
    %v462 = vpop.f32.mrb[0].mxu0
    %v463 = vpop.f32.mrb[0].mxu0
    %v464 = vadd.f32 %v77, %v463
    %v465 = vpop.f32.mrb[0].mxu0
    %466 = vmatprep.mubr.bf16.mxu0 %v333
    %467 = vmatmul.mubr.bf16.gmra.mrb[0].mxu0 %v211
    %v468 = vpop.f32.mrb[0].mxu0
    %v469 = vadd.f32 %v77, %v468
    %v470 = vpop.f32.mrb[0].mxu0
    %v471 = vpop.f32.mrb[0].mxu0
    %v472 = vadd.f32 %v77, %v471
    %v473 = vpop.f32.mrb[0].mxu0
    %474 = vmatprep.mubr.bf16.mxu0 %v336
    %475 = vmatmul.mubr.bf16.gmra.mrb[0].mxu0 %v213
    %v476 = vpop.f32.mrb[0].mxu0
    %v477 = vadd.f32 %v77, %v476
    %v478 = vpop.f32.mrb[0].mxu0
    %v479 = vpop.f32.mrb[0].mxu0
    %v480 = vadd.f32 %v77, %v479
    %v481 = vpop.f32.mrb[0].mxu0
    %482 = vmatprep.mubr.bf16.mxu0 %v339
    %483 = vmatmul.mubr.bf16.gmra.mrb[0].mxu0 %v215
    %v484 = vpop.f32.mrb[0].mxu0
    %v485 = vadd.f32 %v77, %v484
    %v486 = vpop.f32.mrb[0].mxu0
    %v487 = vpop.f32.mrb[0].mxu0
    %v488 = vadd.f32 %v77, %v487
    %v489 = vpop.f32.mrb[0].mxu0
    %490 = vmatprep.mubr.bf16.mxu0 %v342
    %491 = vmatmul.mubr.bf16.gmra.mrb[0].mxu0 %v217
    %v492 = vpop.f32.mrb[0].mxu0
    %v493 = vadd.f32 %v77, %v492
    %v494 = vpop.f32.mrb[0].mxu0
    %v495 = vpop.f32.mrb[0].mxu0
    %v496 = vadd.f32 %v77, %v495
    %v497 = vpop.f32.mrb[0].mxu0
    %498 = vmatprep.mubr.bf16.mxu0 %v345
    %499 = vmatmul.mubr.bf16.gmra.mrb[0].mxu0 %v219
    %v500 = vpop.f32.mrb[0].mxu0
    %v501 = vadd.f32 %v77, %v500
    %v502 = vpop.f32.mrb[0].mxu0
    %v503 = vpop.f32.mrb[0].mxu0
    %v504 = vadd.f32 %v77, %v503
    %v505 = vpop.f32.mrb[0].mxu0
    %506 = vmatprep.mubr.bf16.mxu0 %v348
    %507 = vmatmul.mubr.bf16.gmra.mrb[0].mxu0 %v221
    %v508 = vpop.f32.mrb[0].mxu0
    %v509 = vadd.f32 %v77, %v508
    %v510 = vpop.f32.mrb[0].mxu0
    %v511 = vpop.f32.mrb[0].mxu0
    %v512 = vadd.f32 %v77, %v511
    %v513 = vpop.f32.mrb[0].mxu0
    %514 = vmatprep.mubr.bf16.mxu0 %v351
    %515 = vmatmul.mubr.bf16.gmra.mrb[0].mxu0 %v223
    %v516 = vpop.f32.mrb[0].mxu0
    %v517 = vadd.f32 %v77, %v516
    %v518 = vpop.f32.mrb[0].mxu0
    %v519 = vpop.f32.mrb[0].mxu0
    %v520 = vadd.f32 %v77, %v519
    %v521 = vpop.f32.mrb[0].mxu0
    %522 = vmatprep.mubr.bf16.mxu0 %v354
    %523 = vmatmul.mubr.bf16.gmra.mrb[0].mxu0 %v225
    %v524 = vpop.f32.mrb[0].mxu0
    %v525 = vadd.f32 %v77, %v524
    %v526 = vpop.f32.mrb[0].mxu0
    %v527 = vpop.f32.mrb[0].mxu0
    %v528 = vadd.f32 %v77, %v527
    %v529 = vpop.f32.mrb[0].mxu0
    %530 = vmatprep.mubr.bf16.mxu0 %v357
    %531 = vmatmul.mubr.bf16.gmra.mrb[0].mxu0 %v227
    %v532 = vpop.f32.mrb[0].mxu0
    %v533 = vadd.f32 %v77, %v532
    %v534 = vpop.f32.mrb[0].mxu0
    %v535 = vpop.f32.mrb[0].mxu0
    %v536 = vadd.f32 %v77, %v535
    %v537 = vpop.f32.mrb[0].mxu0
    %538 = vmatprep.mubr.bf16.mxu0 %v360
    %539 = vmatmul.mubr.bf16.gmra.mrb[0].mxu0 %v229
    %v540 = vpop.f32.mrb[0].mxu0
    %v541 = vadd.f32 %v77, %v540
    %v542 = vpop.f32.mrb[0].mxu0
    %v543 = vpop.f32.mrb[0].mxu0
    %v544 = vadd.f32 %v77, %v543
    %v545 = vpop.f32.mrb[0].mxu0
    %546 = vdwg.mxu0
    %v547 = vmax.f32 %v397, 0.0
    %v548 = vmax.f32 %v400, 0.0
    %v549 = vmax.f32 %v405, 0.0
    %v550 = vmax.f32 %v408, 0.0
    %v551 = vmax.f32 %v413, 0.0
    %v552 = vmax.f32 %v416, 0.0
    %v553 = vmax.f32 %v421, 0.0
    %v554 = vmax.f32 %v424, 0.0
    %v555 = vmax.f32 %v429, 0.0
    %v556 = vmax.f32 %v432, 0.0
    %v557 = vmax.f32 %v437, 0.0
    %v558 = vmax.f32 %v440, 0.0
    %v559 = vmax.f32 %v445, 0.0
    %v560 = vmax.f32 %v448, 0.0
    %v561 = vmax.f32 %v453, 0.0
    %v562 = vmax.f32 %v456, 0.0
    %v563 = vmax.f32 %v461, 0.0
    %v564 = vmax.f32 %v464, 0.0
    %v565 = vmax.f32 %v469, 0.0
    %v566 = vmax.f32 %v472, 0.0
    %v567 = vmax.f32 %v477, 0.0
    %v568 = vmax.f32 %v480, 0.0
    %v569 = vmax.f32 %v485, 0.0
    %v570 = vmax.f32 %v488, 0.0
    %v571 = vmax.f32 %v493, 0.0
    %v572 = vmax.f32 %v496, 0.0
    %v573 = vmax.f32 %v501, 0.0
    %v574 = vmax.f32 %v504, 0.0
    %v575 = vmax.f32 %v509, 0.0
    %v576 = vmax.f32 %v512, 0.0
    %v577 = vmax.f32 %v517, 0.0
    %v578 = vmax.f32 %v520, 0.0
    %v579 = vmax.f32 %v525, 0.0
    %v580 = vmax.f32 %v528, 0.0
    %v581 = vmax.f32 %v533, 0.0
    %v582 = vmax.f32 %v536, 0.0
    %v583 = vmax.f32 %v541, 0.0
    %v584 = vmax.f32 %v544, 0.0
    %585 = vst [vmem:[#allocation2] sm:$0xff] %v547
    %586 = vst [vmem:[#allocation2 + $0x8] sm:$0xff] %v548
    %587 = vst [vmem:[#allocation2 + $0x10] sm:$0xff] %v549
    %588 = vst [vmem:[#allocation2 + $0x18] sm:$0xff] %v550
    %589 = vst [vmem:[#allocation2 + $0x20] sm:$0xff] %v551
    %590 = vst [vmem:[#allocation2 + $0x28] sm:$0xff] %v552
    %591 = vst [vmem:[#allocation2 + $0x30] sm:$0xff] %v553
    %592 = vst [vmem:[#allocation2 + $0x38] sm:$0xff] %v554
    %593 = vst [vmem:[#allocation2 + $0x40] sm:$0xff] %v555
    %594 = vst [vmem:[#allocation2 + $0x48] sm:$0xff] %v556
    %595 = vst [vmem:[#allocation2 + $0x50] sm:$0xff] %v557
    %596 = vst [vmem:[#allocation2 + $0x58] sm:$0xff] %v558
    %597 = vst [vmem:[#allocation2 + $0x60] sm:$0xff] %v559
    %598 = vst [vmem:[#allocation2 + $0x68] sm:$0xff] %v560
    %599 = vst [vmem:[#allocation2 + $0x70] sm:$0xff] %v561
    %600 = vst [vmem:[#allocation2 + $0x78] sm:$0xff] %v562
    %601 = vst [vmem:[#allocation2 + $0x80] sm:$0xff] %v563
    %602 = vst [vmem:[#allocation2 + $0x88] sm:$0xff] %v564
    %603 = vst [vmem:[#allocation2 + $0x90] sm:$0xff] %v565
    %604 = vst [vmem:[#allocation2 + $0x98] sm:$0xff] %v566
    %605 = vst [vmem:[#allocation2 + $0xa0] sm:$0xff] %v567
    %606 = vst [vmem:[#allocation2 + $0xa8] sm:$0xff] %v568
    %607 = vst [vmem:[#allocation2 + $0xb0] sm:$0xff] %v569
    %608 = vst [vmem:[#allocation2 + $0xb8] sm:$0xff] %v570
    %609 = vst [vmem:[#allocation2 + $0xc0] sm:$0xff] %v571
    %610 = vst [vmem:[#allocation2 + $0xc8] sm:$0xff] %v572
    %611 = vst [vmem:[#allocation2 + $0xd0] sm:$0xff] %v573
    %612 = vst [vmem:[#allocation2 + $0xd8] sm:$0xff] %v574
    %613 = vst [vmem:[#allocation2 + $0xe0] sm:$0xff] %v575
    %614 = vst [vmem:[#allocation2 + $0xe8] sm:$0xff] %v576
    %615 = vst [vmem:[#allocation2 + $0xf0] sm:$0xff] %v577
    %616 = vst [vmem:[#allocation2 + $0xf8] sm:$0xff] %v578
    %617 = vst [vmem:[#allocation2 + $0x100] sm:$0xff] %v579
    %618 = vst [vmem:[#allocation2 + $0x108] sm:$0xff] %v580
    %619 = vst [vmem:[#allocation2 + $0x110] sm:$0xff] %v581
    %620 = vst [vmem:[#allocation2 + $0x118] sm:$0xff] %v582
    %621 = vst [vmem:[#allocation2 + $0x120] sm:$0xff] %v583
    %622 = vst [vmem:[#allocation2 + $0x128] sm:$0xf] %v584
    // Predicated region
    $region14: #{tpu_custom_call.1} parent=1 // pred_check
      _
    $region15: #{tpu_custom_call.1} parent=1 // pred_check_branch
      %624 = sbr.rel (0) target = $region17
    $region16: #{tpu_custom_call.1} parent=1 // pred_region
      %s626 = ssub.s32 4864, 4864
      %627 = vsyncadd [#allocation3], %s626
      %s628 = sshll.u32 [#allocation2], 4
      %s629 = int_to_ptr.vmem [resolvable:$true] %s628
      %634 = dma.vmem_to_hbm [thread:$0]  %s629, 4864, %s3, [#allocation3], 128, 128, 8
    $region17: #{tpu_custom_call.1} parent=1 // pred_fallthru
      _
    // Predicated region
    $region18: #{tpu_custom_call.1} parent=1 // pred_check
      _
    $region19: #{tpu_custom_call.1} parent=1 // pred_check_branch
      %636 = sbr.rel (0) target = $region21
    $region20: #{tpu_custom_call.1} parent=1 // pred_region
      %637 = dma.done [#allocation3], 4864
    $region21: #{tpu_custom_call.1} parent=1 // pred_fallthru
      _
    %638 = vsyncpa [#allocation3], 1

</llo_original>
